<compile_context>
chip_gen: v6e
topology: v6e:2x2x1
jax: 0.10.0
libtpu: 0.0.40
codegen_flags: <defaults>
</compile_context>

<pallas_src>
import functools

import jax
import jax.numpy as jnp
from jax.experimental import pallas as pl
from jax.experimental.pallas import tpu as pltpu

NEG_SLOPE = 0.01  # torch.nn.functional.leaky_relu default


def _leaky(v):
    return jnp.where(v > 0, v, NEG_SLOPE * v)


def _band_weights(w_hwio, width, pack=1):
    """Fold the 3 W taps (and the SAME zero padding along W) of a 3x3 conv into
    banded matrices; optionally block-diagonal-replicate for `pack` images
    packed side by side along the lane axis.

    w_hwio : (3, 3, Cin, Cout) conv weights, HWIO layout.
    returns: (3, pack*W*Cin, pack*W*Cout) with, per kh and per diagonal block,
        B[(w + kw - 1)*Cin + ci, w*Cout + co] = w_hwio[kh, kw, ci, co].
    """
    _, _, cin, cout = w_hwio.shape
    mats = []
    for kh in range(3):
        m = jnp.zeros((width * cin, width * cout), jnp.float32)
        for kw in range(3):
            shift = jnp.eye(width, width, k=1 - kw, dtype=jnp.float32)
            m = m + jnp.kron(shift, w_hwio[kh, kw].astype(jnp.float32))
        if pack > 1:
            m = jnp.kron(jnp.eye(pack, dtype=jnp.float32), m)
        mats.append(m)
    return jnp.stack(mats)  # (3, pack*W*Cin, pack*W*Cout)


def _res_block_kernel(x_ref, b1_ref, b2_ref, out_ref, xpad, apad, *,
                      identity_residual, images_per_block, mxu_dtype):
    """One grid step = `images_per_block` lane-packed images.

    x_ref  : (B, H, LCin)            input slabs, f32
    b1_ref : (3, LCin, LCout)        conv1 banded weights (one matrix per kh)
    b2_ref : (3, LCout, LCout)       conv2 banded weights
    out_ref: (B, H, LCout)           final activation
    xpad   : VMEM (B*(H+2), LCin)    f32: images stacked along rows, zero halos
    apad   : VMEM (B*(H+2), LCout)   f32: leaky(conv1) in the same layout
    """
    b = images_per_block
    h = out_ref.shape[1]
    lcin = xpad.shape[1]
    lcout = apad.shape[1]
    stride = h + 2
    m = b * stride - 2            # rows covered by the three shifted matmuls

    # ---- stage x into the halo'd slab (zero halo above/below each image) ----
    zin = jnp.zeros((1, lcin), jnp.float32)
    for i in range(b):
        base = i * stride
        xpad[pl.ds(base, 1), :] = zin
        xpad[pl.ds(base + 1, h), :] = x_ref[i]
        xpad[pl.ds(base + h + 1, 1), :] = zin

    def conv(pad_ref, w_ref):
        acc = jnp.zeros((m, lcout), jnp.float32)
        for kh in range(3):
            lhs = pad_ref[pl.ds(kh, m), :].astype(mxu_dtype)
            acc = acc + jnp.dot(lhs, w_ref[kh],
                                preferred_element_type=jnp.float32)
        return acc        # row r == conv output at slab row r + 1

    # ---- conv1: banded matmuls over the whole slab at once ----
    z1 = conv(xpad, b1_ref)
    a1 = _leaky(z1)

    # ---- stage a1 (stays in VMEM); re-zero the halo rows it overwrote ----
    apad[pl.ds(1, m), :] = a1
    zmid = jnp.zeros((1, lcout), jnp.float32)
    for i in range(b):
        base = i * stride
        apad[pl.ds(base, 1), :] = zmid
        apad[pl.ds(base + h + 1, 1), :] = zmid

    # ---- conv2 + residual add + final leaky_relu, stored per image ----
    z2 = conv(apad, b2_ref)
    for i in range(b):
        base = i * stride
        z2_i = z2[base:base + h]
        res = x_ref[i] if identity_residual else z1[base:base + h]
        out_ref[i] = _leaky(z2_i + res).astype(out_ref.dtype)


def res_block_forward_packed(x_packed, b1, b2, *, identity_residual,
                             mxu_dtype=jnp.bfloat16,
                             max_images_per_block=32,
                             vmem_budget_bytes=24 * 1024 * 1024):
    """Core entry: x_packed (n_slab, H, LCin) lane-dense slabs, banded weights."""
    n_slab, h, lcin = x_packed.shape
    lcout = b1.shape[2]
    wbytes = 2 * 3 * (lcin + lcout) * lcout * jnp.dtype(mxu_dtype).itemsize

    def vmem_cost(nb):
        rows = nb * (h + 2)
        scratch = rows * (lcin + lcout) * 4
        temps = 3 * rows * lcout * 4              # z1 / a1 / z2 f32 temporaries
        io = 2 * nb * h * (lcin + lcout) * 4      # double-buffered in/out blocks
        return scratch + temps + io + wbytes

    # As many images per grid step as fit a conservative VMEM budget.
    b_slab = 1
    for cand in range(min(n_slab, max_images_per_block), 0, -1):
        if n_slab % cand == 0 and vmem_cost(cand) <= vmem_budget_bytes:
            b_slab = cand
            break
    grid = (n_slab // b_slab,)

    kernel = functools.partial(
        _res_block_kernel, identity_residual=identity_residual,
        images_per_block=b_slab, mxu_dtype=mxu_dtype)

    # TODO(synk): for much larger W*C, tile along W (band per W-tile), add an
    # H-strip grid axis, single-buffer the constant-index weight specs with
    # pipeline_mode=pl.Buffered(1) and raise vmem_limit_bytes; the banded
    # weights are O((W*C)^2) and would otherwise outgrow v7x's 64 MiB VMEM.
    return pl.pallas_call(
        kernel,
        out_shape=jax.ShapeDtypeStruct((n_slab, h, lcout), jnp.float32),
        grid_spec=pltpu.PrefetchScalarGridSpec(
            num_scalar_prefetch=0,
            grid=grid,
            in_specs=[
                pl.BlockSpec((b_slab, h, lcin), lambda i: (i, 0, 0)),
                pl.BlockSpec((3, lcin, lcout), lambda i: (0, 0, 0)),
                pl.BlockSpec((3, lcout, lcout), lambda i: (0, 0, 0)),
            ],
            out_specs=pl.BlockSpec((b_slab, h, lcout), lambda i: (i, 0, 0)),
            scratch_shapes=[
                pltpu.VMEM((b_slab * (h + 2), lcin), jnp.float32),   # x  slab
                pltpu.VMEM((b_slab * (h + 2), lcout), jnp.float32),  # a1 slab
            ],
        ),
        compiler_params=pltpu.CompilerParams(
            dimension_semantics=("parallel",)),
    )(x_packed, b1, b2)


def res_block_forward(x_nchw, w1_oihw, w2_oihw, in_channels, out_channels,
                      mxu_dtype=jnp.bfloat16):
    """Pallas ResBlock.forward with PyTorch NCHW/OIHW layouts at the boundary.

    TODO(synk): keeping the surrounding model in the lane-dense packed layout
    (calling res_block_forward_packed directly) removes the two HBM-bound
    transposes below, which at these shapes cost more than the kernel itself.
    """
    n, cin, h, w = x_nchw.shape
    cout = out_channels
    assert cin == in_channels
    assert w1_oihw.shape == (cout, cin, 3, 3) and w2_oihw.shape == (cout, cout, 3, 3)

    # Lane-pack factor: put P images side by side along lanes so the matmul N
    # and the output store are a multiple of 128 lanes (unmasked vst).
    p, lane = 1, w * cout
    while lane % 128 != 0 and n % (2 * p) == 0 and lane < 512:
        p, lane = 2 * p, 2 * lane
    if lane % 128 != 0:
        p = 1
    n_slab = n // p

    # NCHW -> lane-dense packed slabs (one 5-D transpose each direction).
    xp = x_nchw.reshape(n_slab, p, cin, h, w).astype(jnp.float32)
    xp = jnp.transpose(xp, (0, 3, 1, 4, 2)).reshape(n_slab, h, p * w * cin)

    w1 = jnp.transpose(w1_oihw, (2, 3, 1, 0))        # OIHW -> HWIO
    w2 = jnp.transpose(w2_oihw, (2, 3, 1, 0))
    b1 = _band_weights(w1, w, p).astype(mxu_dtype)   # (3, P*W*Cin,  P*W*Cout)
    b2 = _band_weights(w2, w, p).astype(mxu_dtype)   # (3, P*W*Cout, P*W*Cout)

    out_packed = res_block_forward_packed(
        xp, b1, b2, identity_residual=(cin == cout), mxu_dtype=mxu_dtype)

    out = out_packed.reshape(n_slab, h, p, w, cout)
    out = jnp.transpose(out, (0, 2, 4, 1, 3)).reshape(n, cout, h, w)
    return out


def _ref_res_block(x_nchw, w1_oihw, w2_oihw, in_channels, out_channels):
    """Pure-JAX reference mirroring the PyTorch forward (f32, HIGHEST precision)."""
    def conv(v, w_oihw):
        return jax.lax.conv_general_dilated(
            v, w_oihw, window_strides=(1, 1), padding=((1, 1), (1, 1)),
            dimension_numbers=("NCHW", "OIHW", "NCHW"),
            precision=jax.lax.Precision.HIGHEST)

    if in_channels == out_channels:
        y = _leaky(conv(x_nchw, w1_oihw))
        y = conv(y, w2_oihw)
        return _leaky(x_nchw + y)
    c1 = conv(x_nchw, w1_oihw)
    y = conv(_leaky(c1), w2_oihw)
    return _leaky(c1 + y)


if __name__ == "__main__":
    key = jax.random.PRNGKey(0)
    kx, kw1a, kw2a, kw1b, kw2b = jax.random.split(key, 5)

    N, H, W = 2, 16, 16
    x = jax.random.normal(kx, (N, 4, H, W), dtype=jnp.float32)

    # Case 1: in_channels == out_channels (4 -> 4), residual is the input x.
    #   W*Cout = 64 -> the two images get lane-packed into 128 lanes.
    cin, cout = 4, 4
    w1 = 0.1 * jax.random.normal(kw1a, (cout, cin, 3, 3), dtype=jnp.float32)
    w2 = 0.1 * jax.random.normal(kw2a, (cout, cout, 3, 3), dtype=jnp.float32)
    ref = _ref_res_block(x, w1, w2, cin, cout)

    out = jax.block_until_ready(res_block_forward(x, w1, w2, cin, cout))
    assert out.shape == (N, cout, H, W)
    assert jnp.allclose(out, ref, atol=1e-2, rtol=1e-2), "mismatch (cin==cout, bf16)"

    # Same case with f32 MXU operands: tighter accuracy check.
    out_f32 = jax.block_until_ready(
        res_block_forward(x, w1, w2, cin, cout, mxu_dtype=jnp.float32))
    assert jnp.allclose(out_f32, ref, atol=2e-3, rtol=2e-3), "mismatch (cin==cout, f32)"

    # Case 2: in_channels != out_channels (4 -> 8), residual is conv1 output.
    #   W*Cout = 128 is already lane-dense -> both images stack along rows.
    cin2, cout2 = 4, 8
    w1b = 0.1 * jax.random.normal(kw1b, (cout2, cin2, 3, 3), dtype=jnp.float32)
    w2b = 0.1 * jax.random.normal(kw2b, (cout2, cout2, 3, 3), dtype=jnp.float32)
    ref2 = _ref_res_block(x, w1b, w2b, cin2, cout2)

    out2 = jax.block_until_ready(res_block_forward(x, w1b, w2b, cin2, cout2))
    assert out2.shape == (N, cout2, H, W)
    assert jnp.allclose(out2, ref2, atol=1e-2, rtol=1e-2), "mismatch (cin!=cout, bf16)"

    print("KERNEL_OK")
</pallas_src>

<mosaic_0001>
module attributes {stable_mosaic.version = 11 : i64} {
  func.func @_res_block_kernel(%arg0: i32, %arg1: memref<1x16x128xf32, #tpu.memory_space<vmem>>, %arg2: memref<3x128x128xbf16, #tpu.memory_space<vmem>>, %arg3: memref<3x128x128xbf16, #tpu.memory_space<vmem>>, %arg4: memref<1x16x128xf32, #tpu.memory_space<vmem>>, %arg5: memref<18x128xf32, #tpu.memory_space<vmem>>, %arg6: memref<18x128xf32, #tpu.memory_space<vmem>>) attributes {dimension_semantics = [#tpu.dimension_semantics<parallel>], iteration_bounds = array<i64: 1>, scalar_prefetch = 0 : i64, scratch_operands = 2 : i64, tpu.core_type = #tpu.core_type<tc>, window_params = [{transform_indices = @transform_0, window_bounds = array<i64: 1, 16, 128>}, {pipeline_mode = #tpu.pipeline_mode<synchronous>, transform_indices = @transform_1, window_bounds = array<i64: 3, 128, 128>}, {pipeline_mode = #tpu.pipeline_mode<synchronous>, transform_indices = @transform_2, window_bounds = array<i64: 3, 128, 128>}, {transform_indices = @transform_3, window_bounds = array<i64: 1, 16, 128>}]} {
    %cst = arith.constant 0.000000e+00 : f32
    %0 = vector.broadcast %cst : f32 to vector<1x128xf32>
    %c0 = arith.constant 0 : index
    %c0_0 = arith.constant 0 : index
    %1 = vector.load %arg5[%c0, %c0_0] : memref<18x128xf32, #tpu.memory_space<vmem>>, vector<1x128xf32>
    tpu.vector_store %arg5[%c0, %c0_0], %0 {strides = array<i32>} : memref<18x128xf32, #tpu.memory_space<vmem>>, vector<1x128xf32>,
    %c0_1 = arith.constant 0 : index
    %c0_2 = arith.constant 0 : index
    %c0_3 = arith.constant 0 : index
    %2 = vector.load %arg1[%c0_1, %c0_2, %c0_3] : memref<1x16x128xf32, #tpu.memory_space<vmem>>, vector<1x16x128xf32>
    %3 = vector.shape_cast %2 : vector<1x16x128xf32> to vector<16x128xf32>
    %c1 = arith.constant 1 : index
    %c0_4 = arith.constant 0 : index
    %4 = vector.load %arg5[%c1, %c0_4] : memref<18x128xf32, #tpu.memory_space<vmem>>, vector<16x128xf32>
    tpu.vector_store %arg5[%c1, %c0_4], %3 {strides = array<i32>} : memref<18x128xf32, #tpu.memory_space<vmem>>, vector<16x128xf32>,
    %c17 = arith.constant 17 : index
    %c0_5 = arith.constant 0 : index
    %5 = vector.load %arg5[%c17, %c0_5] : memref<18x128xf32, #tpu.memory_space<vmem>>, vector<1x128xf32>
    tpu.vector_store %arg5[%c17, %c0_5], %0 {strides = array<i32>} : memref<18x128xf32, #tpu.memory_space<vmem>>, vector<1x128xf32>,
    %cst_6 = arith.constant 0.000000e+00 : f32
    %6 = vector.broadcast %cst_6 : f32 to vector<16x128xf32>
    %c0_7 = arith.constant 0 : index
    %c0_8 = arith.constant 0 : index
    %7 = vector.load %arg5[%c0_7, %c0_8] : memref<18x128xf32, #tpu.memory_space<vmem>>, vector<16x128xf32>
    %8 = arith.truncf %7 : vector<16x128xf32> to vector<16x128xbf16>
    %c0_9 = arith.constant 0 : index
    %c0_10 = arith.constant 0 : index
    %c0_11 = arith.constant 0 : index
    %9 = vector.load %arg2[%c0_9, %c0_10, %c0_11] : memref<3x128x128xbf16, #tpu.memory_space<vmem>>, vector<1x128x128xbf16>
    %10 = vector.shape_cast %9 : vector<1x128x128xbf16> to vector<128x128xbf16>
    %cst_12 = arith.constant dense<0.000000e+00> : vector<16x128xf32>
    %11 = tpu.matmul %8, %10, %cst_12 {dimension_numbers = #tpu.dot_dimension_numbers<[1], [0], [0], [1], [0, 0, 1, 1], [], []>} : vector<16x128xbf16>, vector<128x128xbf16>, vector<16x128xf32> -> vector<16x128xf32>
    %12 = arith.addf %6, %11 : vector<16x128xf32>
    %c1_13 = arith.constant 1 : index
    %c0_14 = arith.constant 0 : index
    %13 = vector.load %arg5[%c1_13, %c0_14] : memref<18x128xf32, #tpu.memory_space<vmem>>, vector<16x128xf32>
    %14 = arith.truncf %13 : vector<16x128xf32> to vector<16x128xbf16>
    %c1_15 = arith.constant 1 : index
    %c0_16 = arith.constant 0 : index
    %c0_17 = arith.constant 0 : index
    %15 = vector.load %arg2[%c1_15, %c0_16, %c0_17] : memref<3x128x128xbf16, #tpu.memory_space<vmem>>, vector<1x128x128xbf16>
    %16 = vector.shape_cast %15 : vector<1x128x128xbf16> to vector<128x128xbf16>
    %cst_18 = arith.constant dense<0.000000e+00> : vector<16x128xf32>
    %17 = tpu.matmul %14, %16, %cst_18 {dimension_numbers = #tpu.dot_dimension_numbers<[1], [0], [0], [1], [0, 0, 1, 1], [], []>} : vector<16x128xbf16>, vector<128x128xbf16>, vector<16x128xf32> -> vector<16x128xf32>
    %18 = arith.addf %12, %17 : vector<16x128xf32>
    %c2 = arith.constant 2 : index
    %c0_19 = arith.constant 0 : index
    %19 = vector.load %arg5[%c2, %c0_19] : memref<18x128xf32, #tpu.memory_space<vmem>>, vector<16x128xf32>
    %20 = arith.truncf %19 : vector<16x128xf32> to vector<16x128xbf16>
    %c2_20 = arith.constant 2 : index
    %c0_21 = arith.constant 0 : index
    %c0_22 = arith.constant 0 : index
    %21 = vector.load %arg2[%c2_20, %c0_21, %c0_22] : memref<3x128x128xbf16, #tpu.memory_space<vmem>>, vector<1x128x128xbf16>
    %22 = vector.shape_cast %21 : vector<1x128x128xbf16> to vector<128x128xbf16>
    %cst_23 = arith.constant dense<0.000000e+00> : vector<16x128xf32>
    %23 = tpu.matmul %20, %22, %cst_23 {dimension_numbers = #tpu.dot_dimension_numbers<[1], [0], [0], [1], [0, 0, 1, 1], [], []>} : vector<16x128xbf16>, vector<128x128xbf16>, vector<16x128xf32> -> vector<16x128xf32>
    %24 = arith.addf %18, %23 : vector<16x128xf32>
    %cst_24 = arith.constant 0.000000e+00 : f32
    %25 = vector.broadcast %cst_24 : f32 to vector<16x128xf32>
    %26 = arith.cmpf ogt, %24, %25 : vector<16x128xf32>
    %cst_25 = arith.constant 0.00999999977 : f32
    %27 = vector.broadcast %cst_25 : f32 to vector<16x128xf32>
    %28 = arith.mulf %27, %24 : vector<16x128xf32>
    %29 = arith.select %26, %24, %28 : vector<16x128xi1>, vector<16x128xf32>
    %c1_26 = arith.constant 1 : index
    %c0_27 = arith.constant 0 : index
    %30 = vector.load %arg6[%c1_26, %c0_27] : memref<18x128xf32, #tpu.memory_space<vmem>>, vector<16x128xf32>
    tpu.vector_store %arg6[%c1_26, %c0_27], %29 {strides = array<i32>} : memref<18x128xf32, #tpu.memory_space<vmem>>, vector<16x128xf32>,
    %cst_28 = arith.constant 0.000000e+00 : f32
    %31 = vector.broadcast %cst_28 : f32 to vector<1x128xf32>
    %c0_29 = arith.constant 0 : index
    %c0_30 = arith.constant 0 : index
    %32 = vector.load %arg6[%c0_29, %c0_30] : memref<18x128xf32, #tpu.memory_space<vmem>>, vector<1x128xf32>
    tpu.vector_store %arg6[%c0_29, %c0_30], %31 {strides = array<i32>} : memref<18x128xf32, #tpu.memory_space<vmem>>, vector<1x128xf32>,
    %c17_31 = arith.constant 17 : index
    %c0_32 = arith.constant 0 : index
    %33 = vector.load %arg6[%c17_31, %c0_32] : memref<18x128xf32, #tpu.memory_space<vmem>>, vector<1x128xf32>
    tpu.vector_store %arg6[%c17_31, %c0_32], %31 {strides = array<i32>} : memref<18x128xf32, #tpu.memory_space<vmem>>, vector<1x128xf32>,
    %cst_33 = arith.constant 0.000000e+00 : f32
    %34 = vector.broadcast %cst_33 : f32 to vector<16x128xf32>
    %c0_34 = arith.constant 0 : index
    %c0_35 = arith.constant 0 : index
    %35 = vector.load %arg6[%c0_34, %c0_35] : memref<18x128xf32, #tpu.memory_space<vmem>>, vector<16x128xf32>
    %36 = arith.truncf %35 : vector<16x128xf32> to vector<16x128xbf16>
    %c0_36 = arith.constant 0 : index
    %c0_37 = arith.constant 0 : index
    %c0_38 = arith.constant 0 : index
    %37 = vector.load %arg3[%c0_36, %c0_37, %c0_38] : memref<3x128x128xbf16, #tpu.memory_space<vmem>>, vector<1x128x128xbf16>
    %38 = vector.shape_cast %37 : vector<1x128x128xbf16> to vector<128x128xbf16>
    %cst_39 = arith.constant dense<0.000000e+00> : vector<16x128xf32>
    %39 = tpu.matmul %36, %38, %cst_39 {dimension_numbers = #tpu.dot_dimension_numbers<[1], [0], [0], [1], [0, 0, 1, 1], [], []>} : vector<16x128xbf16>, vector<128x128xbf16>, vector<16x128xf32> -> vector<16x128xf32>
    %40 = arith.addf %34, %39 : vector<16x128xf32>
    %c1_40 = arith.constant 1 : index
    %c0_41 = arith.constant 0 : index
    %41 = vector.load %arg6[%c1_40, %c0_41] : memref<18x128xf32, #tpu.memory_space<vmem>>, vector<16x128xf32>
    %42 = arith.truncf %41 : vector<16x128xf32> to vector<16x128xbf16>
    %c1_42 = arith.constant 1 : index
    %c0_43 = arith.constant 0 : index
    %c0_44 = arith.constant 0 : index
    %43 = vector.load %arg3[%c1_42, %c0_43, %c0_44] : memref<3x128x128xbf16, #tpu.memory_space<vmem>>, vector<1x128x128xbf16>
    %44 = vector.shape_cast %43 : vector<1x128x128xbf16> to vector<128x128xbf16>
    %cst_45 = arith.constant dense<0.000000e+00> : vector<16x128xf32>
    %45 = tpu.matmul %42, %44, %cst_45 {dimension_numbers = #tpu.dot_dimension_numbers<[1], [0], [0], [1], [0, 0, 1, 1], [], []>} : vector<16x128xbf16>, vector<128x128xbf16>, vector<16x128xf32> -> vector<16x128xf32>
    %46 = arith.addf %40, %45 : vector<16x128xf32>
    %c2_46 = arith.constant 2 : index
    %c0_47 = arith.constant 0 : index
    %47 = vector.load %arg6[%c2_46, %c0_47] : memref<18x128xf32, #tpu.memory_space<vmem>>, vector<16x128xf32>
    %48 = arith.truncf %47 : vector<16x128xf32> to vector<16x128xbf16>
    %c2_48 = arith.constant 2 : index
    %c0_49 = arith.constant 0 : index
    %c0_50 = arith.constant 0 : index
    %49 = vector.load %arg3[%c2_48, %c0_49, %c0_50] : memref<3x128x128xbf16, #tpu.memory_space<vmem>>, vector<1x128x128xbf16>
    %50 = vector.shape_cast %49 : vector<1x128x128xbf16> to vector<128x128xbf16>
    %cst_51 = arith.constant dense<0.000000e+00> : vector<16x128xf32>
    %51 = tpu.matmul %48, %50, %cst_51 {dimension_numbers = #tpu.dot_dimension_numbers<[1], [0], [0], [1], [0, 0, 1, 1], [], []>} : vector<16x128xbf16>, vector<128x128xbf16>, vector<16x128xf32> -> vector<16x128xf32>
    %52 = arith.addf %46, %51 : vector<16x128xf32>
    %c0_52 = arith.constant 0 : index
    %c0_53 = arith.constant 0 : index
    %c0_54 = arith.constant 0 : index
    %53 = vector.load %arg1[%c0_52, %c0_53, %c0_54] : memref<1x16x128xf32, #tpu.memory_space<vmem>>, vector<1x16x128xf32>
    %54 = vector.shape_cast %53 : vector<1x16x128xf32> to vector<16x128xf32>
    %55 = arith.addf %52, %54 : vector<16x128xf32>
    %cst_55 = arith.constant 0.000000e+00 : f32
    %56 = vector.broadcast %cst_55 : f32 to vector<16x128xf32>
    %57 = arith.cmpf ogt, %55, %56 : vector<16x128xf32>
    %cst_56 = arith.constant 0.00999999977 : f32
    %58 = vector.broadcast %cst_56 : f32 to vector<16x128xf32>
    %59 = arith.mulf %58, %55 : vector<16x128xf32>
    %60 = arith.select %57, %55, %59 : vector<16x128xi1>, vector<16x128xf32>
    %c0_57 = arith.constant 0 : index
    %c0_58 = arith.constant 0 : index
    %c0_59 = arith.constant 0 : index
    %61 = vector.load %arg4[%c0_57, %c0_58, %c0_59] : memref<1x16x128xf32, #tpu.memory_space<vmem>>, vector<1x16x128xf32>
    %62 = vector.shape_cast %61 : vector<1x16x128xf32> to vector<16x128xf32>
    %63 = vector.shape_cast %60 : vector<16x128xf32> to vector<1x16x128xf32>
    tpu.vector_store %arg4[%c0_57, %c0_58, %c0_59], %63 {strides = array<i32>} : memref<1x16x128xf32, #tpu.memory_space<vmem>>, vector<1x16x128xf32>,
    return
  }
  func.func @transform_0(%arg0: i32) -> (i32, i32, i32) {
    %c0_i32 = arith.constant 0 : i32
    %c0_i32_0 = arith.constant 0 : i32
    %c0_i32_1 = arith.constant 0 : i32
    return %arg0, %c0_i32, %c0_i32_0 : i32, i32, i32
  }
  func.func @transform_1(%arg0: i32) -> (i32, i32, i32) {
    %c0_i32 = arith.constant 0 : i32
    %c0_i32_0 = arith.constant 0 : i32
    %c0_i32_1 = arith.constant 0 : i32
    %c0_i32_2 = arith.constant 0 : i32
    return %c0_i32, %c0_i32_0, %c0_i32_1 : i32, i32, i32
  }
  func.func @transform_2(%arg0: i32) -> (i32, i32, i32) {
    %c0_i32 = arith.constant 0 : i32
    %c0_i32_0 = arith.constant 0 : i32
    %c0_i32_1 = arith.constant 0 : i32
    %c0_i32_2 = arith.constant 0 : i32
    return %c0_i32, %c0_i32_0, %c0_i32_1 : i32, i32, i32
  }
  func.func @transform_3(%arg0: i32) -> (i32, i32, i32) {
    %c0_i32 = arith.constant 0 : i32
    %c0_i32_0 = arith.constant 0 : i32
    %c0_i32_1 = arith.constant 0 : i32
    return %arg0, %c0_i32, %c0_i32_0 : i32, i32, i32
  }
}

</mosaic_0001>

<llo_original>
// kernel: tpu_custom_call.1
$region0: #{tpu_custom_call.1}
  #allocation0 [shape = 'u32[]', space=smem, size = 0x4, offset = 0x4, fixed_abs, tag = 'smem constant byte address 0x4 - core index']
  #allocation1 [shape = 'u32[144,128]{1,0:T(1,128)}', space=vmem, size = 0x12000, scoped, tag = 'internal scratch']
  #allocation2 [shape = 'f32[18,128]{1,0:T(8,128)}', space=vmem, size = 0x3000, scoped, tag = 'scratch operand']
  #allocation3 [shape = 'f32[18,128]{1,0:T(8,128)}', space=vmem, size = 0x3000, scoped, tag = 'scratch operand']
  %s0 = inlined_call_operand.hbm [shape: f32[1,16,128], index: 0, kind: input, shape index: {}]
  %s1 = inlined_call_operand.hbm [shape: bf16[3,128,128], index: 1, kind: input, shape index: {}]
  %s2 = inlined_call_operand.hbm [shape: bf16[3,128,128], index: 2, kind: input, shape index: {}]
  %s3 = inlined_call_operand.hbm [shape: f32[1,16,128], index: 3, kind: output, shape index: {}]
  %s4 = sld [smem:[#allocation0]]
  $region34: #{tpu_custom_call.1} parent=0
    _
  %s6 = ssub.s32 1, %s4
  %s7 = scalar_select 0, %s6, %s4
  $region1: #{tpu_custom_call.1} parent=0
    #allocation4 [shape = 'u8[8192]{0}', space=vmem, size = 0x2000, scoped, tag = 'input window, operand 0, single buffered']
    #allocation5 [shape = 's32[1]{0}', space=sflag, size = 0x4, scoped, tag = 'scoped memory for tpu_custom_call.1']
    #allocation6 [shape = 's32[1]{0}', space=sflag, size = 0x4, scoped, tag = 'scoped memory for tpu_custom_call.1']
    #allocation7 [shape = 'u8[98304]{0}', space=vmem, size = 0x18000, scoped, tag = 'input window, operand 1, single buffered']
    #allocation8 [shape = 's32[1]{0}', space=sflag, size = 0x4, scoped, tag = 'scoped memory for tpu_custom_call.1']
    #allocation9 [shape = 'u8[98304]{0}', space=vmem, size = 0x18000, scoped, tag = 'input window, operand 2, single buffered']
    #allocation10 [shape = 'u8[8192]{0}', space=vmem, size = 0x2000, scoped, tag = 'output window, operand 0, single buffered']
    %8 = vsyncpa [#allocation5], 0
    %9 = vsyncpa [#allocation8], 0
    %10 = vsyncpa [#allocation6], 0
    // Predicated region
    $region2: #{tpu_custom_call.1} parent=1 // pred_check
      _
    $region3: #{tpu_custom_call.1} parent=1 // pred_check_branch
      %12 = sbr.rel (0) target = $region5
    $region4: #{tpu_custom_call.1} parent=1 // pred_region
      %s14 = ssub.s32 256, 256
      %15 = vsyncadd [#allocation5], %s14
      %s16 = sshll.u32 [#allocation4], 4
      %s17 = int_to_ptr.vmem [resolvable:$true] %s16
      %22 = dma.hbm_to_vmem [thread:$0]  %s0, 256, %s17, [#allocation5], 128, 128, 8
    $region5: #{tpu_custom_call.1} parent=1 // pred_fallthru
      _
    // Predicated region
    $region6: #{tpu_custom_call.1} parent=1 // pred_check
      _
    $region7: #{tpu_custom_call.1} parent=1 // pred_check_branch
      %24 = sbr.rel (0) target = $region9
    $region8: #{tpu_custom_call.1} parent=1 // pred_region
      %s26 = ssub.s32 3072, 3072
      %27 = vsyncadd [#allocation8], %s26
      %s28 = sshll.u32 [#allocation7], 4
      %s29 = int_to_ptr.vmem [resolvable:$true] %s28
      %34 = dma.hbm_to_vmem [thread:$0]  %s1, 3072, %s29, [#allocation8], 64, 64, 4
    $region9: #{tpu_custom_call.1} parent=1 // pred_fallthru
      _
    // Predicated region
    $region10: #{tpu_custom_call.1} parent=1 // pred_check
      _
    $region11: #{tpu_custom_call.1} parent=1 // pred_check_branch
      %36 = sbr.rel (0) target = $region13
    $region12: #{tpu_custom_call.1} parent=1 // pred_region
      %s38 = ssub.s32 3072, 3072
      %39 = vsyncadd [#allocation8], %s38
      %s40 = sshll.u32 [#allocation9], 4
      %s41 = int_to_ptr.vmem [resolvable:$true] %s40
      %46 = dma.hbm_to_vmem [thread:$0]  %s2, 3072, %s41, [#allocation8], 64, 64, 4
    $region13: #{tpu_custom_call.1} parent=1 // pred_fallthru
      _
    // Predicated region
    $region14: #{tpu_custom_call.1} parent=1 // pred_check
      _
    $region15: #{tpu_custom_call.1} parent=1 // pred_check_branch
      %48 = sbr.rel (0) target = $region17
    $region16: #{tpu_custom_call.1} parent=1 // pred_region
      %49 = dma.done [#allocation5], 256
    $region17: #{tpu_custom_call.1} parent=1 // pred_fallthru
      _
    // Predicated region
    $region18: #{tpu_custom_call.1} parent=1 // pred_check
      _
    $region19: #{tpu_custom_call.1} parent=1 // pred_check_branch
      %51 = sbr.rel (0) target = $region21
    $region20: #{tpu_custom_call.1} parent=1 // pred_region
      %52 = dma.done [#allocation8], 3072
    $region21: #{tpu_custom_call.1} parent=1 // pred_fallthru
      _
    // Predicated region
    $region22: #{tpu_custom_call.1} parent=1 // pred_check
      _
    $region23: #{tpu_custom_call.1} parent=1 // pred_check_branch
      %54 = sbr.rel (0) target = $region25
    $region24: #{tpu_custom_call.1} parent=1 // pred_region
      %55 = dma.done [#allocation8], 3072
    $region25: #{tpu_custom_call.1} parent=1 // pred_fallthru
      _
    %57 = vst [vmem:[#allocation2] sm:$0x1] 0.0
    %v58 = vld [vmem:[#allocation4] sm:$0xff]
    %v59 = vld [vmem:[#allocation4 + $0x8] sm:$0xff]
    %60 = vst [vmem:[#allocation2 + $0x1] sm:$0xff] %v58
    %61 = vst [vmem:[#allocation2 + $0x9] sm:$0xff] %v59
    %62 = vst [vmem:[#allocation2 + $0x11] sm:$0x1] 0.0
    %v63 = vld [vmem:[#allocation2] sm:$0xff]
    %v64 = vld [vmem:[#allocation2 + $0x8] sm:$0xff]
    %v65 = vpack.c.bf16 %v64, %v63
    %v66 = vld [vmem:[#allocation7] sm:$0xf]
    %v67 = vld [vmem:[#allocation7 + $0x4] sm:$0xf]
    %v68 = vld [vmem:[#allocation7 + $0x8] sm:$0xf]
    %v69 = vld [vmem:[#allocation7 + $0xc] sm:$0xf]
    %v70 = vld [vmem:[#allocation7 + $0x10] sm:$0xf]
    %v71 = vld [vmem:[#allocation7 + $0x14] sm:$0xf]
    %v72 = vld [vmem:[#allocation7 + $0x18] sm:$0xf]
    %v73 = vld [vmem:[#allocation7 + $0x1c] sm:$0xf]
    %v74 = vld [vmem:[#allocation7 + $0x20] sm:$0xf]
    %v75 = vld [vmem:[#allocation7 + $0x24] sm:$0xf]
    %v76 = vld [vmem:[#allocation7 + $0x28] sm:$0xf]
    %v77 = vld [vmem:[#allocation7 + $0x2c] sm:$0xf]
    %v78 = vld [vmem:[#allocation7 + $0x30] sm:$0xf]
    %v79 = vld [vmem:[#allocation7 + $0x34] sm:$0xf]
    %v80 = vld [vmem:[#allocation7 + $0x38] sm:$0xf]
    %v81 = vld [vmem:[#allocation7 + $0x3c] sm:$0xf]
    %v82 = vld [vmem:[#allocation2 + $0x1] sm:$0xff]
    %v83 = vld [vmem:[#allocation2 + $0x9] sm:$0xff]
    %v84 = vpack.c.bf16 %v83, %v82
    %s85 = scalar_lea.vmem [#allocation7], 64
    %v86 = vld [vmem:[%s85] sm:$0xf]
    %v87 = vld [vmem:[%s85 + $0x4] sm:$0xf]
    %v88 = vld [vmem:[%s85 + $0x8] sm:$0xf]
    %v89 = vld [vmem:[%s85 + $0xc] sm:$0xf]
    %v90 = vld [vmem:[%s85 + $0x10] sm:$0xf]
    %v91 = vld [vmem:[%s85 + $0x14] sm:$0xf]
    %v92 = vld [vmem:[%s85 + $0x18] sm:$0xf]
    %v93 = vld [vmem:[%s85 + $0x1c] sm:$0xf]
    %v94 = vld [vmem:[%s85 + $0x20] sm:$0xf]
    %v95 = vld [vmem:[%s85 + $0x24] sm:$0xf]
    %v96 = vld [vmem:[%s85 + $0x28] sm:$0xf]
    %v97 = vld [vmem:[%s85 + $0x2c] sm:$0xf]
    %v98 = vld [vmem:[%s85 + $0x30] sm:$0xf]
    %v99 = vld [vmem:[%s85 + $0x34] sm:$0xf]
    %v100 = vld [vmem:[%s85 + $0x38] sm:$0xf]
    %v101 = vld [vmem:[%s85 + $0x3c] sm:$0xf]
    %v118 = vunpack.c.l.b16 %v86
    %v119 = vunpack.c.l.b16 %v87
    %v120 = vunpack.c.l.b16 %v88
    %v121 = vunpack.c.l.b16 %v89
    %v122 = vunpack.c.l.b16 %v90
    %v123 = vunpack.c.l.b16 %v91
    %v124 = vunpack.c.l.b16 %v92
    %v125 = vunpack.c.l.b16 %v93
    %v126 = vunpack.c.l.b16 %v94
    %v127 = vunpack.c.l.b16 %v95
    %v128 = vunpack.c.l.b16 %v96
    %v129 = vunpack.c.l.b16 %v97
    %v130 = vunpack.c.l.b16 %v98
    %v131 = vunpack.c.l.b16 %v99
    %v132 = vunpack.c.l.b16 %v100
    %v133 = vunpack.c.l.b16 %v101
    %v134 = vpack.c.b16 %v119, %v118
    %v135 = vpack.c.b16 %v121, %v120
    %v136 = vpack.c.b16 %v123, %v122
    %v137 = vpack.c.b16 %v125, %v124
    %v138 = vpack.c.b16 %v127, %v126
    %v139 = vpack.c.b16 %v129, %v128
    %v140 = vpack.c.b16 %v131, %v130
    %v141 = vpack.c.b16 %v133, %v132
    %150 = vmatprep.subr.bf16.mxu0 0
    %151 = vmatpush1.bf16.msra.mxu0 %v141
    %152 = vmatprep.subr.bf16.mxu0 0
    %153 = vmatpush1.bf16.msra.mxu0 %v140
    %154 = vmatprep.subr.bf16.mxu0 0
    %155 = vmatpush1.bf16.msra.mxu0 %v139
    %156 = vmatprep.subr.bf16.mxu0 0
    %157 = vmatpush1.bf16.msra.mxu0 %v138
    %158 = vmatprep.subr.bf16.mxu0 0
    %159 = vmatpush1.bf16.msra.mxu0 %v137
    %160 = vmatprep.subr.bf16.mxu0 0
    %161 = vmatpush1.bf16.msra.mxu0 %v136
    %162 = vmatprep.subr.bf16.mxu0 0
    %163 = vmatpush1.bf16.msra.mxu0 %v135
    %164 = vmatprep.subr.bf16.mxu0 0
    %165 = vmatpush1.bf16.msra.mxu0 %v134
    %166 = vmatprep.subr.bf16.mxu0 0
    %167 = vmatpush2.bf16.msra.mxu0 0
    %168 = vmatprep.subr.bf16.mxu0 0
    %169 = vmatpush2.bf16.msra.mxu0 0
    %170 = vmatprep.subr.bf16.mxu0 0
    %171 = vmatpush2.bf16.msra.mxu0 0
    %172 = vmatprep.subr.bf16.mxu0 0
    %173 = vmatpush2.bf16.msra.mxu0 0
    %174 = vmatprep.subr.bf16.mxu0 0
    %175 = vmatpush2.bf16.msra.mxu0 0
    %176 = vmatprep.subr.bf16.mxu0 0
    %177 = vmatpush2.bf16.msra.mxu0 0
    %178 = vmatprep.subr.bf16.mxu0 0
    %179 = vmatpush2.bf16.msra.mxu0 0
    %180 = vmatprep.subr.bf16.mxu0 0
    %181 = vmatpush2.bf16.msra.mxu0 0
    %182 = vmatprep.mubr.bf16.mxu0 0
    %183 = vmatmul.mubr.bf16.gmra.mxu0 %v84
    %v184 = vpop.f32.mrf.mxu0
    %v185 = vadd.f32 0.0, %v184
    %v186 = vpop.f32.mrf.mxu0
    %v187 = vpop.f32.mrf.mxu0
    %v188 = vadd.f32 0.0, %v187
    %v189 = vpop.f32.mrf.mxu0
    %190 = vdwg.mxu0
    %v207 = vunpack.c.l.b16 %v66
    %v208 = vunpack.c.l.b16 %v67
    %v209 = vunpack.c.l.b16 %v68
    %v210 = vunpack.c.l.b16 %v69
    %v211 = vunpack.c.l.b16 %v70
    %v212 = vunpack.c.l.b16 %v71
    %v213 = vunpack.c.l.b16 %v72
    %v214 = vunpack.c.l.b16 %v73
    %v215 = vunpack.c.l.b16 %v74
    %v216 = vunpack.c.l.b16 %v75
    %v217 = vunpack.c.l.b16 %v76
    %v218 = vunpack.c.l.b16 %v77
    %v219 = vunpack.c.l.b16 %v78
    %v220 = vunpack.c.l.b16 %v79
    %v221 = vunpack.c.l.b16 %v80
    %v222 = vunpack.c.l.b16 %v81
    %v223 = vpack.c.b16 %v208, %v207
    %v224 = vpack.c.b16 %v210, %v209
    %v225 = vpack.c.b16 %v212, %v211
    %v226 = vpack.c.b16 %v214, %v213
    %v227 = vpack.c.b16 %v216, %v215
    %v228 = vpack.c.b16 %v218, %v217
    %v229 = vpack.c.b16 %v220, %v219
    %v230 = vpack.c.b16 %v222, %v221
    %239 = vmatprep.subr.bf16.mxu0 0
    %240 = vmatpush1.bf16.msra.mxu0 %v230
    %241 = vmatprep.subr.bf16.mxu0 0
    %242 = vmatpush1.bf16.msra.mxu0 %v229
    %243 = vmatprep.subr.bf16.mxu0 0
    %244 = vmatpush1.bf16.msra.mxu0 %v228
    %245 = vmatprep.subr.bf16.mxu0 0
    %246 = vmatpush1.bf16.msra.mxu0 %v227
    %247 = vmatprep.subr.bf16.mxu0 0
    %248 = vmatpush1.bf16.msra.mxu0 %v226
    %249 = vmatprep.subr.bf16.mxu0 0
    %250 = vmatpush1.bf16.msra.mxu0 %v225
    %251 = vmatprep.subr.bf16.mxu0 0
    %252 = vmatpush1.bf16.msra.mxu0 %v224
    %253 = vmatprep.subr.bf16.mxu0 0
    %254 = vmatpush1.bf16.msra.mxu0 %v223
    %255 = vmatprep.subr.bf16.mxu0 0
    %256 = vmatpush2.bf16.msra.mxu0 0
    %257 = vmatprep.subr.bf16.mxu0 0
    %258 = vmatpush2.bf16.msra.mxu0 0
    %259 = vmatprep.subr.bf16.mxu0 0
    %260 = vmatpush2.bf16.msra.mxu0 0
    %261 = vmatprep.subr.bf16.mxu0 0
    %262 = vmatpush2.bf16.msra.mxu0 0
    %263 = vmatprep.subr.bf16.mxu0 0
    %264 = vmatpush2.bf16.msra.mxu0 0
    %265 = vmatprep.subr.bf16.mxu0 0
    %266 = vmatpush2.bf16.msra.mxu0 0
    %267 = vmatprep.subr.bf16.mxu0 0
    %268 = vmatpush2.bf16.msra.mxu0 0
    %269 = vmatprep.subr.bf16.mxu0 0
    %270 = vmatpush2.bf16.msra.mxu0 0
    %271 = vmatprep.mubr.bf16.mxu0 0
    %272 = vmatmul.mubr.bf16.gmra.mxu0 %v65
    %v273 = vpop.f32.mrf.mxu0
    %v274 = vadd.f32 %v185, %v273
    %v275 = vpop.f32.mrf.mxu0
    %v276 = vpop.f32.mrf.mxu0
    %v277 = vadd.f32 %v188, %v276
    %v278 = vpop.f32.mrf.mxu0
    %279 = vdwg.mxu0
    %v280 = vld [vmem:[#allocation2 + $0x2] sm:$0xff]
    %v281 = vld [vmem:[#allocation2 + $0xa] sm:$0xff]
    %v282 = vpack.c.bf16 %v281, %v280
    %s283 = scalar_lea.vmem [#allocation7], 128
    %v284 = vld [vmem:[%s283] sm:$0xf]
    %v285 = vld [vmem:[%s283 + $0x4] sm:$0xf]
    %v286 = vld [vmem:[%s283 + $0x8] sm:$0xf]
    %v287 = vld [vmem:[%s283 + $0xc] sm:$0xf]
    %v288 = vld [vmem:[%s283 + $0x10] sm:$0xf]
    %v289 = vld [vmem:[%s283 + $0x14] sm:$0xf]
    %v290 = vld [vmem:[%s283 + $0x18] sm:$0xf]
    %v291 = vld [vmem:[%s283 + $0x1c] sm:$0xf]
    %v292 = vld [vmem:[%s283 + $0x20] sm:$0xf]
    %v293 = vld [vmem:[%s283 + $0x24] sm:$0xf]
    %v294 = vld [vmem:[%s283 + $0x28] sm:$0xf]
    %v295 = vld [vmem:[%s283 + $0x2c] sm:$0xf]
    %v296 = vld [vmem:[%s283 + $0x30] sm:$0xf]
    %v297 = vld [vmem:[%s283 + $0x34] sm:$0xf]
    %v298 = vld [vmem:[%s283 + $0x38] sm:$0xf]
    %v299 = vld [vmem:[%s283 + $0x3c] sm:$0xf]
    %v316 = vunpack.c.l.b16 %v284
    %v317 = vunpack.c.l.b16 %v285
    %v318 = vunpack.c.l.b16 %v286
    %v319 = vunpack.c.l.b16 %v287
    %v320 = vunpack.c.l.b16 %v288
    %v321 = vunpack.c.l.b16 %v289
    %v322 = vunpack.c.l.b16 %v290
    %v323 = vunpack.c.l.b16 %v291
    %v324 = vunpack.c.l.b16 %v292
    %v325 = vunpack.c.l.b16 %v293
    %v326 = vunpack.c.l.b16 %v294
    %v327 = vunpack.c.l.b16 %v295
    %v328 = vunpack.c.l.b16 %v296
    %v329 = vunpack.c.l.b16 %v297
    %v330 = vunpack.c.l.b16 %v298
    %v331 = vunpack.c.l.b16 %v299
    %v332 = vpack.c.b16 %v317, %v316
    %v333 = vpack.c.b16 %v319, %v318
    %v334 = vpack.c.b16 %v321, %v320
    %v335 = vpack.c.b16 %v323, %v322
    %v336 = vpack.c.b16 %v325, %v324
    %v337 = vpack.c.b16 %v327, %v326
    %v338 = vpack.c.b16 %v329, %v328
    %v339 = vpack.c.b16 %v331, %v330
    %348 = vmatprep.subr.bf16.mxu0 0
    %349 = vmatpush1.bf16.msra.mxu0 %v339
    %350 = vmatprep.subr.bf16.mxu0 0
    %351 = vmatpush1.bf16.msra.mxu0 %v338
    %352 = vmatprep.subr.bf16.mxu0 0
    %353 = vmatpush1.bf16.msra.mxu0 %v337
    %354 = vmatprep.subr.bf16.mxu0 0
    %355 = vmatpush1.bf16.msra.mxu0 %v336
    %356 = vmatprep.subr.bf16.mxu0 0
    %357 = vmatpush1.bf16.msra.mxu0 %v335
    %358 = vmatprep.subr.bf16.mxu0 0
    %359 = vmatpush1.bf16.msra.mxu0 %v334
    %360 = vmatprep.subr.bf16.mxu0 0
    %361 = vmatpush1.bf16.msra.mxu0 %v333
    %362 = vmatprep.subr.bf16.mxu0 0
    %363 = vmatpush1.bf16.msra.mxu0 %v332
    %364 = vmatprep.subr.bf16.mxu0 0
    %365 = vmatpush2.bf16.msra.mxu0 0
    %366 = vmatprep.subr.bf16.mxu0 0
    %367 = vmatpush2.bf16.msra.mxu0 0
    %368 = vmatprep.subr.bf16.mxu0 0
    %369 = vmatpush2.bf16.msra.mxu0 0
    %370 = vmatprep.subr.bf16.mxu0 0
    %371 = vmatpush2.bf16.msra.mxu0 0
    %372 = vmatprep.subr.bf16.mxu0 0
    %373 = vmatpush2.bf16.msra.mxu0 0
    %374 = vmatprep.subr.bf16.mxu0 0
    %375 = vmatpush2.bf16.msra.mxu0 0
    %376 = vmatprep.subr.bf16.mxu0 0
    %377 = vmatpush2.bf16.msra.mxu0 0
    %378 = vmatprep.subr.bf16.mxu0 0
    %379 = vmatpush2.bf16.msra.mxu0 0
    %380 = vmatprep.mubr.bf16.mxu0 0
    %381 = vmatmul.mubr.bf16.gmra.mxu0 %v282
    %v382 = vpop.f32.mrf.mxu0
    %v383 = vadd.f32 0.0, %v382
    %v384 = vpop.f32.mrf.mxu0
    %v385 = vpop.f32.mrf.mxu0
    %v386 = vadd.f32 0.0, %v385
    %v387 = vpop.f32.mrf.mxu0
    %388 = vdwg.mxu0
    %v389 = vadd.f32 %v274, %v383
    %v390 = vadd.f32 %v277, %v386
    %vm391 = vcmp.gt.f32.partialorder %v389, 0.0
    %vm392 = vcmp.gt.f32.partialorder %v390, 0.0
    %v393 = vmul.f32 %v389, 0.01
    %v394 = vmul.f32 %v390, 0.01
    %v395 = vsel %vm391, %v389, %v393
    %v396 = vsel %vm392, %v390, %v394
    %397 = vst [vmem:[#allocation3 + $0x1] sm:$0xff] %v395
    %398 = vst [vmem:[#allocation3 + $0x9] sm:$0xff] %v396
    %399 = vst [vmem:[#allocation3] sm:$0x1] 0.0
    %400 = vst [vmem:[#allocation3 + $0x11] sm:$0x1] 0.0
    %v401 = vld [vmem:[#allocation3] sm:$0xff]
    %v402 = vld [vmem:[#allocation3 + $0x8] sm:$0xff]
    %v403 = vpack.c.bf16 %v402, %v401
    %v404 = vld [vmem:[#allocation9] sm:$0xf]
    %v405 = vld [vmem:[#allocation9 + $0x4] sm:$0xf]
    %v406 = vld [vmem:[#allocation9 + $0x8] sm:$0xf]
    %v407 = vld [vmem:[#allocation9 + $0xc] sm:$0xf]
    %v408 = vld [vmem:[#allocation9 + $0x10] sm:$0xf]
    %v409 = vld [vmem:[#allocation9 + $0x14] sm:$0xf]
    %v410 = vld [vmem:[#allocation9 + $0x18] sm:$0xf]
    %v411 = vld [vmem:[#allocation9 + $0x1c] sm:$0xf]
    %v412 = vld [vmem:[#allocation9 + $0x20] sm:$0xf]
    %v413 = vld [vmem:[#allocation9 + $0x24] sm:$0xf]
    %v414 = vld [vmem:[#allocation9 + $0x28] sm:$0xf]
    %v415 = vld [vmem:[#allocation9 + $0x2c] sm:$0xf]
    %v416 = vld [vmem:[#allocation9 + $0x30] sm:$0xf]
    %v417 = vld [vmem:[#allocation9 + $0x34] sm:$0xf]
    %v418 = vld [vmem:[#allocation9 + $0x38] sm:$0xf]
    %v419 = vld [vmem:[#allocation9 + $0x3c] sm:$0xf]
    %v420 = vld [vmem:[#allocation3 + $0x1] sm:$0xff]
    %v421 = vld [vmem:[#allocation3 + $0x9] sm:$0xff]
    %v422 = vpack.c.bf16 %v421, %v420
    %s423 = scalar_lea.vmem [#allocation9], 64
    %v424 = vld [vmem:[%s423] sm:$0xf]
    %v425 = vld [vmem:[%s423 + $0x4] sm:$0xf]
    %v426 = vld [vmem:[%s423 + $0x8] sm:$0xf]
    %v427 = vld [vmem:[%s423 + $0xc] sm:$0xf]
    %v428 = vld [vmem:[%s423 + $0x10] sm:$0xf]
    %v429 = vld [vmem:[%s423 + $0x14] sm:$0xf]
    %v430 = vld [vmem:[%s423 + $0x18] sm:$0xf]
    %v431 = vld [vmem:[%s423 + $0x1c] sm:$0xf]
    %v432 = vld [vmem:[%s423 + $0x20] sm:$0xf]
    %v433 = vld [vmem:[%s423 + $0x24] sm:$0xf]
    %v434 = vld [vmem:[%s423 + $0x28] sm:$0xf]
    %v435 = vld [vmem:[%s423 + $0x2c] sm:$0xf]
    %v436 = vld [vmem:[%s423 + $0x30] sm:$0xf]
    %v437 = vld [vmem:[%s423 + $0x34] sm:$0xf]
    %v438 = vld [vmem:[%s423 + $0x38] sm:$0xf]
    %v439 = vld [vmem:[%s423 + $0x3c] sm:$0xf]
    %v456 = vunpack.c.l.b16 %v424
    %v457 = vunpack.c.l.b16 %v425
    %v458 = vunpack.c.l.b16 %v426
    %v459 = vunpack.c.l.b16 %v427
    %v460 = vunpack.c.l.b16 %v428
    %v461 = vunpack.c.l.b16 %v429
    %v462 = vunpack.c.l.b16 %v430
    %v463 = vunpack.c.l.b16 %v431
    %v464 = vunpack.c.l.b16 %v432
    %v465 = vunpack.c.l.b16 %v433
    %v466 = vunpack.c.l.b16 %v434
    %v467 = vunpack.c.l.b16 %v435
    %v468 = vunpack.c.l.b16 %v436
    %v469 = vunpack.c.l.b16 %v437
    %v470 = vunpack.c.l.b16 %v438
    %v471 = vunpack.c.l.b16 %v439
    %v472 = vpack.c.b16 %v457, %v456
    %v473 = vpack.c.b16 %v459, %v458
    %v474 = vpack.c.b16 %v461, %v460
    %v475 = vpack.c.b16 %v463, %v462
    %v476 = vpack.c.b16 %v465, %v464
    %v477 = vpack.c.b16 %v467, %v466
    %v478 = vpack.c.b16 %v469, %v468
    %v479 = vpack.c.b16 %v471, %v470
    %488 = vmatprep.subr.bf16.mxu0 0
    %489 = vmatpush1.bf16.msra.mxu0 %v479
    %490 = vmatprep.subr.bf16.mxu0 0
    %491 = vmatpush1.bf16.msra.mxu0 %v478
    %492 = vmatprep.subr.bf16.mxu0 0
    %493 = vmatpush1.bf16.msra.mxu0 %v477
    %494 = vmatprep.subr.bf16.mxu0 0
    %495 = vmatpush1.bf16.msra.mxu0 %v476
    %496 = vmatprep.subr.bf16.mxu0 0
    %497 = vmatpush1.bf16.msra.mxu0 %v475
    %498 = vmatprep.subr.bf16.mxu0 0
    %499 = vmatpush1.bf16.msra.mxu0 %v474
    %500 = vmatprep.subr.bf16.mxu0 0
    %501 = vmatpush1.bf16.msra.mxu0 %v473
    %502 = vmatprep.subr.bf16.mxu0 0
    %503 = vmatpush1.bf16.msra.mxu0 %v472
    %504 = vmatprep.subr.bf16.mxu0 0
    %505 = vmatpush2.bf16.msra.mxu0 0
    %506 = vmatprep.subr.bf16.mxu0 0
    %507 = vmatpush2.bf16.msra.mxu0 0
    %508 = vmatprep.subr.bf16.mxu0 0
    %509 = vmatpush2.bf16.msra.mxu0 0
    %510 = vmatprep.subr.bf16.mxu0 0
    %511 = vmatpush2.bf16.msra.mxu0 0
    %512 = vmatprep.subr.bf16.mxu0 0
    %513 = vmatpush2.bf16.msra.mxu0 0
    %514 = vmatprep.subr.bf16.mxu0 0
    %515 = vmatpush2.bf16.msra.mxu0 0
    %516 = vmatprep.subr.bf16.mxu0 0
    %517 = vmatpush2.bf16.msra.mxu0 0
    %518 = vmatprep.subr.bf16.mxu0 0
    %519 = vmatpush2.bf16.msra.mxu0 0
    %520 = vmatprep.mubr.bf16.mxu0 0
    %521 = vmatmul.mubr.bf16.gmra.mxu0 %v422
    %v522 = vpop.f32.mrf.mxu0
    %v523 = vadd.f32 0.0, %v522
    %v524 = vpop.f32.mrf.mxu0
    %v525 = vpop.f32.mrf.mxu0
    %v526 = vadd.f32 0.0, %v525
    %v527 = vpop.f32.mrf.mxu0
    %528 = vdwg.mxu0
    %v545 = vunpack.c.l.b16 %v404
    %v546 = vunpack.c.l.b16 %v405
    %v547 = vunpack.c.l.b16 %v406
    %v548 = vunpack.c.l.b16 %v407
    %v549 = vunpack.c.l.b16 %v408
    %v550 = vunpack.c.l.b16 %v409
    %v551 = vunpack.c.l.b16 %v410
    %v552 = vunpack.c.l.b16 %v411
    %v553 = vunpack.c.l.b16 %v412
    %v554 = vunpack.c.l.b16 %v413
    %v555 = vunpack.c.l.b16 %v414
    %v556 = vunpack.c.l.b16 %v415
    %v557 = vunpack.c.l.b16 %v416
    %v558 = vunpack.c.l.b16 %v417
    %v559 = vunpack.c.l.b16 %v418
    %v560 = vunpack.c.l.b16 %v419
    %v561 = vpack.c.b16 %v546, %v545
    %v562 = vpack.c.b16 %v548, %v547
    %v563 = vpack.c.b16 %v550, %v549
    %v564 = vpack.c.b16 %v552, %v551
    %v565 = vpack.c.b16 %v554, %v553
    %v566 = vpack.c.b16 %v556, %v555
    %v567 = vpack.c.b16 %v558, %v557
    %v568 = vpack.c.b16 %v560, %v559
    %577 = vmatprep.subr.bf16.mxu0 0
    %578 = vmatpush1.bf16.msra.mxu0 %v568
    %579 = vmatprep.subr.bf16.mxu0 0
    %580 = vmatpush1.bf16.msra.mxu0 %v567
    %581 = vmatprep.subr.bf16.mxu0 0
    %582 = vmatpush1.bf16.msra.mxu0 %v566
    %583 = vmatprep.subr.bf16.mxu0 0
    %584 = vmatpush1.bf16.msra.mxu0 %v565
    %585 = vmatprep.subr.bf16.mxu0 0
    %586 = vmatpush1.bf16.msra.mxu0 %v564
    %587 = vmatprep.subr.bf16.mxu0 0
    %588 = vmatpush1.bf16.msra.mxu0 %v563
    %589 = vmatprep.subr.bf16.mxu0 0
    %590 = vmatpush1.bf16.msra.mxu0 %v562
    %591 = vmatprep.subr.bf16.mxu0 0
    %592 = vmatpush1.bf16.msra.mxu0 %v561
    %593 = vmatprep.subr.bf16.mxu0 0
    %594 = vmatpush2.bf16.msra.mxu0 0
    %595 = vmatprep.subr.bf16.mxu0 0
    %596 = vmatpush2.bf16.msra.mxu0 0
    %597 = vmatprep.subr.bf16.mxu0 0
    %598 = vmatpush2.bf16.msra.mxu0 0
    %599 = vmatprep.subr.bf16.mxu0 0
    %600 = vmatpush2.bf16.msra.mxu0 0
    %601 = vmatprep.subr.bf16.mxu0 0
    %602 = vmatpush2.bf16.msra.mxu0 0
    %603 = vmatprep.subr.bf16.mxu0 0
    %604 = vmatpush2.bf16.msra.mxu0 0
    %605 = vmatprep.subr.bf16.mxu0 0
    %606 = vmatpush2.bf16.msra.mxu0 0
    %607 = vmatprep.subr.bf16.mxu0 0
    %608 = vmatpush2.bf16.msra.mxu0 0
    %609 = vmatprep.mubr.bf16.mxu0 0
    %610 = vmatmul.mubr.bf16.gmra.mxu0 %v403
    %v611 = vpop.f32.mrf.mxu0
    %v612 = vadd.f32 %v523, %v611
    %v613 = vpop.f32.mrf.mxu0
    %v614 = vpop.f32.mrf.mxu0
    %v615 = vadd.f32 %v526, %v614
    %v616 = vpop.f32.mrf.mxu0
    %617 = vdwg.mxu0
    %v618 = vld [vmem:[#allocation3 + $0x2] sm:$0xff]
    %v619 = vld [vmem:[#allocation3 + $0xa] sm:$0xff]
    %v620 = vpack.c.bf16 %v619, %v618
    %s621 = scalar_lea.vmem [#allocation9], 128
    %v622 = vld [vmem:[%s621] sm:$0xf]
    %v623 = vld [vmem:[%s621 + $0x4] sm:$0xf]
    %v624 = vld [vmem:[%s621 + $0x8] sm:$0xf]
    %v625 = vld [vmem:[%s621 + $0xc] sm:$0xf]
    %v626 = vld [vmem:[%s621 + $0x10] sm:$0xf]
    %v627 = vld [vmem:[%s621 + $0x14] sm:$0xf]
    %v628 = vld [vmem:[%s621 + $0x18] sm:$0xf]
    %v629 = vld [vmem:[%s621 + $0x1c] sm:$0xf]
    %v630 = vld [vmem:[%s621 + $0x20] sm:$0xf]
    %v631 = vld [vmem:[%s621 + $0x24] sm:$0xf]
    %v632 = vld [vmem:[%s621 + $0x28] sm:$0xf]
    %v633 = vld [vmem:[%s621 + $0x2c] sm:$0xf]
    %v634 = vld [vmem:[%s621 + $0x30] sm:$0xf]
    %v635 = vld [vmem:[%s621 + $0x34] sm:$0xf]
    %v636 = vld [vmem:[%s621 + $0x38] sm:$0xf]
    %v637 = vld [vmem:[%s621 + $0x3c] sm:$0xf]
    %v654 = vunpack.c.l.b16 %v622
    %v655 = vunpack.c.l.b16 %v623
    %v656 = vunpack.c.l.b16 %v624
    %v657 = vunpack.c.l.b16 %v625
    %v658 = vunpack.c.l.b16 %v626
    %v659 = vunpack.c.l.b16 %v627
    %v660 = vunpack.c.l.b16 %v628
    %v661 = vunpack.c.l.b16 %v629
    %v662 = vunpack.c.l.b16 %v630
    %v663 = vunpack.c.l.b16 %v631
    %v664 = vunpack.c.l.b16 %v632
    %v665 = vunpack.c.l.b16 %v633
    %v666 = vunpack.c.l.b16 %v634
    %v667 = vunpack.c.l.b16 %v635
    %v668 = vunpack.c.l.b16 %v636
    %v669 = vunpack.c.l.b16 %v637
    %v670 = vpack.c.b16 %v655, %v654
    %v671 = vpack.c.b16 %v657, %v656
    %v672 = vpack.c.b16 %v659, %v658
    %v673 = vpack.c.b16 %v661, %v660
    %v674 = vpack.c.b16 %v663, %v662
    %v675 = vpack.c.b16 %v665, %v664
    %v676 = vpack.c.b16 %v667, %v666
    %v677 = vpack.c.b16 %v669, %v668
    %686 = vmatprep.subr.bf16.mxu0 0
    %687 = vmatpush1.bf16.msra.mxu0 %v677
    %688 = vmatprep.subr.bf16.mxu0 0
    %689 = vmatpush1.bf16.msra.mxu0 %v676
    %690 = vmatprep.subr.bf16.mxu0 0
    %691 = vmatpush1.bf16.msra.mxu0 %v675
    %692 = vmatprep.subr.bf16.mxu0 0
    %693 = vmatpush1.bf16.msra.mxu0 %v674
    %694 = vmatprep.subr.bf16.mxu0 0
    %695 = vmatpush1.bf16.msra.mxu0 %v673
    %696 = vmatprep.subr.bf16.mxu0 0
    %697 = vmatpush1.bf16.msra.mxu0 %v672
    %698 = vmatprep.subr.bf16.mxu0 0
    %699 = vmatpush1.bf16.msra.mxu0 %v671
    %700 = vmatprep.subr.bf16.mxu0 0
    %701 = vmatpush1.bf16.msra.mxu0 %v670
    %702 = vmatprep.subr.bf16.mxu0 0
    %703 = vmatpush2.bf16.msra.mxu0 0
    %704 = vmatprep.subr.bf16.mxu0 0
    %705 = vmatpush2.bf16.msra.mxu0 0
    %706 = vmatprep.subr.bf16.mxu0 0
    %707 = vmatpush2.bf16.msra.mxu0 0
    %708 = vmatprep.subr.bf16.mxu0 0
    %709 = vmatpush2.bf16.msra.mxu0 0
    %710 = vmatprep.subr.bf16.mxu0 0
    %711 = vmatpush2.bf16.msra.mxu0 0
    %712 = vmatprep.subr.bf16.mxu0 0
    %713 = vmatpush2.bf16.msra.mxu0 0
    %714 = vmatprep.subr.bf16.mxu0 0
    %715 = vmatpush2.bf16.msra.mxu0 0
    %716 = vmatprep.subr.bf16.mxu0 0
    %717 = vmatpush2.bf16.msra.mxu0 0
    %718 = vmatprep.mubr.bf16.mxu0 0
    %719 = vmatmul.mubr.bf16.gmra.mxu0 %v620
    %v720 = vpop.f32.mrf.mxu0
    %v721 = vadd.f32 0.0, %v720
    %v722 = vpop.f32.mrf.mxu0
    %v723 = vpop.f32.mrf.mxu0
    %v724 = vadd.f32 0.0, %v723
    %v725 = vpop.f32.mrf.mxu0
    %726 = vdwg.mxu0
    %v727 = vadd.f32 %v612, %v721
    %v728 = vadd.f32 %v615, %v724
    %v729 = vld [vmem:[#allocation4] sm:$0xff]
    %v730 = vld [vmem:[#allocation4 + $0x8] sm:$0xff]
    %v731 = vadd.f32 %v727, %v729
    %v732 = vadd.f32 %v728, %v730
    %vm733 = vcmp.gt.f32.partialorder %v731, 0.0
    %vm734 = vcmp.gt.f32.partialorder %v732, 0.0
    %v735 = vmul.f32 %v731, 0.01
    %v736 = vmul.f32 %v732, 0.01
    %v737 = vsel %vm733, %v731, %v735
    %v738 = vsel %vm734, %v732, %v736
    %739 = vst [vmem:[#allocation10] sm:$0xff] %v737
    %740 = vst [vmem:[#allocation10 + $0x8] sm:$0xff] %v738
    // Predicated region
    $region26: #{tpu_custom_call.1} parent=1 // pred_check
      _
    $region27: #{tpu_custom_call.1} parent=1 // pred_check_branch
      %742 = sbr.rel (0) target = $region29
    $region28: #{tpu_custom_call.1} parent=1 // pred_region
      %s744 = ssub.s32 256, 256
      %745 = vsyncadd [#allocation6], %s744
      %s746 = sshll.u32 [#allocation10], 4
      %s747 = int_to_ptr.vmem [resolvable:$true] %s746
      %752 = dma.vmem_to_hbm [thread:$0]  %s747, 256, %s3, [#allocation6], 128, 128, 8
    $region29: #{tpu_custom_call.1} parent=1 // pred_fallthru
      _
    // Predicated region
    $region30: #{tpu_custom_call.1} parent=1 // pred_check
      _
    $region31: #{tpu_custom_call.1} parent=1 // pred_check_branch
      %754 = sbr.rel (0) target = $region33
    $region32: #{tpu_custom_call.1} parent=1 // pred_region
      %755 = dma.done [#allocation6], 256
    $region33: #{tpu_custom_call.1} parent=1 // pred_fallthru
      _
    %756 = vsyncpa [#allocation5], 1
    %757 = vsyncpa [#allocation8], 1
    %758 = vsyncpa [#allocation6], 1

</llo_original>
